<compile_context>
chip_gen: v7x
topology: tpu7x:2x2x1
jax: 0.10.0
libtpu: 0.0.40
codegen_flags: <defaults>
</compile_context>

<pallas_src>
import jax
import jax.numpy as jnp
from jax import lax
from jax.experimental import pallas as pl
from jax.experimental.pallas import tpu as pltpu

SPARSITY_COEFF = 0.0004  # Vanilla.sparsity_coeff (module has no learnable params)

_SUBLANE = 8     # accumulator rows == vreg sublanes
_CHUNK = 8       # rows per inner-loop step (== _SUBLANE -> accumulate with no fold)
_MAX_TB = 1024   # ~HBM-roofline-saturating tile height


def _cdiv(a, b):
    return -(-a // b)


def _num_tensorcores():
    """2 TensorCores/chip on v7x, 1 on v5e/v6e.  Default 1 (always correct)."""
    try:
        kind = (getattr(jax.devices()[0], "device_kind", "") or "").lower()
    except Exception:
        return 1
    return 2 if "v7" in kind else 1


def _vmem_capacity_bytes(n_cores):
    try:
        cap = int(pltpu.get_tpu_info().vmem_capacity_bytes)
    except Exception:
        cap = 64 << 20
    # Per-TensorCore physical ceilings: 128 MiB (v5e/v6e), 64 MiB (v7x).
    return min(cap, (64 << 20) if n_cores == 2 else (128 << 20))


def _build_kernel(*, tb, nb, batch, needs_mask):
    n_chunks = tb // _CHUNK
    unroll = n_chunks if n_chunks <= 8 else 2

    def kernel(x_ref, xhat_ref, f_ref, mse_ref, l0_ref, l1_ref,
               mse_acc, l0_acc, l1_acc):
        i = pl.program_id(1)

        @pl.when(i == 0)
        def _init():
            mse_acc[...] = jnp.zeros_like(mse_acc)
            l0_acc[...] = jnp.zeros_like(l0_acc)
            l1_acc[...] = jnp.zeros_like(l1_acc)

        # Unclamped global row offset of this tile (used for tail masking).
        row_start = (pl.program_id(0) * nb + i) * tb

        def accumulate(masked):
            def body(c, carry):
                r = pl.multiple_of(c * _CHUNK, _CHUNK)
                xs = x_ref[pl.ds(r, _CHUNK), :].astype(jnp.float32)
                xh = xhat_ref[pl.ds(r, _CHUNK), :].astype(jnp.float32)
                fs = f_ref[pl.ds(r, _CHUNK), :]
                diff = xh - xs
                sq = diff * diff
                l0v = (fs > 0).astype(jnp.float32)   # compare in input dtype
                l1v = fs.astype(jnp.float32)
                if masked:
                    rows = lax.broadcasted_iota(jnp.int32, (_CHUNK, 1), 0)
                    valid = (row_start + r + rows) < batch
                    # where-select (not multiply): OOB rows may hold garbage/NaN.
                    sq = jnp.where(valid, sq, 0.0)
                    l0v = jnp.where(valid, l0v, 0.0)
                    l1v = jnp.where(valid, l1v, 0.0)
                mse_acc[...] += sq
                l0_acc[...] += l0v
                l1_acc[...] += l1v
                return carry

            lax.fori_loop(0, n_chunks, body, 0, unroll=unroll)

        if needs_mask:
            tile_full = row_start + tb <= batch

            @pl.when(tile_full)
            def _full_tile():
                accumulate(False)

            @pl.when(jnp.logical_not(tile_full))
            def _tail_tile():
                accumulate(True)
        else:
            accumulate(False)

        @pl.when(i == nb - 1)
        def _finalize():
            # One cross-lane reduce per core for the whole kernel.
            mse_ref[0, 0] = jnp.sum(mse_acc[...])
            l0_ref[0, 0] = jnp.sum(l0_acc[...])
            l1_ref[0, 0] = jnp.sum(l1_acc[...])

    return kernel


def vanilla_objective(x, f_x, x_hat, sparsity_coeff=SPARSITY_COEFF):
    """Returns dict of scalar loss terms (loss, mse, sparsity, l0, l1)."""
    x = jnp.asarray(x)
    x_hat = jnp.asarray(x_hat)
    f_x = jnp.asarray(f_x)
    batch, d_model = x.shape
    _, d_sae = f_x.shape

    n_hw = _num_tensorcores()
    cap = _vmem_capacity_bytes(n_hw)

    # Batch-tile sizing.  Inputs are the only large VMEM users: the kernel streams
    # 8-row chunks, so f32 intermediates stay at a few MiB regardless of tb.
    bytes_per_row = ((x.dtype.itemsize + x_hat.dtype.itemsize) * d_model
                     + f_x.dtype.itemsize * d_sae)
    acc_bytes = 4 * _SUBLANE * (d_model + 2 * d_sae)
    tile_budget = max(int(cap * 0.45) - acc_bytes - (4 << 20), 1 << 20)
    tb = tile_budget // (2 * bytes_per_row)              # 2x: double-buffered DMA
    tb = max(_CHUNK, min(_MAX_TB, (tb // _CHUNK) * _CHUNK))
    # Don't give one core more rows than it has; round down to the chunk size so only
    # the final tile can be ragged (batch < 8 gives a single taller-than-array tile,
    # handled like any partial block + masked).
    per_core = max(_CHUNK, (_cdiv(batch, n_hw) // _CHUNK) * _CHUNK)
    tb = min(tb, per_core)

    total_tiles = _cdiv(batch, tb)
    n_split = max(1, min(n_hw, total_tiles))   # never launch an empty core
    nb = _cdiv(total_tiles, n_split)
    needs_mask = (n_split * nb * tb != batch)
    last_block = total_tiles - 1

    # The grid may be padded to n_split*nb tiles; clamp the block index so an
    # out-of-range tile just re-reads the last real block (its contribution is
    # masked to zero in-kernel via the unclamped row_start).
    def row_map(c, i):
        return (jnp.minimum(c * nb + i, last_block), 0)

    scalar_out = pl.BlockSpec((1, 1), lambda c, i: (c, 0),
                              memory_space=pltpu.MemorySpace.SMEM)

    kernel = _build_kernel(tb=tb, nb=nb, batch=batch, needs_mask=needs_mask)

    cost = pl.CostEstimate(
        flops=batch * (3 * d_model + 3 * d_sae),
        transcendentals=0,
        bytes_accessed=batch * bytes_per_row + 3 * 4 * n_split)

    mse_p, l0_p, l1_p = pl.pallas_call(
        kernel,
        out_shape=(
            jax.ShapeDtypeStruct((n_split, 1), jnp.float32),
            jax.ShapeDtypeStruct((n_split, 1), jnp.float32),
            jax.ShapeDtypeStruct((n_split, 1), jnp.float32),
        ),
        grid=(n_split, nb),
        in_specs=[
            pl.BlockSpec((tb, d_model), row_map),   # x      (unpadded feature dim)
            pl.BlockSpec((tb, d_model), row_map),   # x_hat
            pl.BlockSpec((tb, d_sae), row_map),     # f_x
        ],
        out_specs=(scalar_out, scalar_out, scalar_out),
        scratch_shapes=[
            pltpu.VMEM((_SUBLANE, d_model), jnp.float32),   # mse accumulator
            pltpu.VMEM((_SUBLANE, d_sae), jnp.float32),     # l0 accumulator
            pltpu.VMEM((_SUBLANE, d_sae), jnp.float32),     # l1 accumulator
        ],
        compiler_params=pltpu.CompilerParams(
            dimension_semantics=("parallel", "arbitrary"),
            vmem_limit_bytes=int(cap * 0.85),
        ),
        cost_estimate=cost,
    )(x, x_hat, f_x)

    mse = jnp.sum(mse_p) / jnp.float32(batch * d_model)
    l0 = jnp.sum(l0_p) / jnp.float32(batch)
    l1 = jnp.sum(l1_p) / jnp.float32(batch)
    sparsity = jnp.float32(sparsity_coeff) * l1
    loss = mse + sparsity
    return {"loss": loss, "mse": mse, "sparsity": sparsity, "l0": l0, "l1": l1}


def _reference(x, f_x, x_hat, sparsity_coeff=SPARSITY_COEFF):
    # Mirrors the PyTorch code exactly (including the upper scaling round-trip).
    upper = jnp.max(jnp.abs(x))
    mse = ((x_hat / upper - x / upper) ** 2) * upper * upper
    mse = mse.mean()
    l0 = (f_x > 0).astype(jnp.float32).sum(axis=1).mean(axis=0)
    l1 = f_x.sum(axis=1).mean(axis=0)
    sparsity = sparsity_coeff * l1
    return {"loss": mse + sparsity, "mse": mse, "sparsity": sparsity,
            "l0": l0, "l1": l1}


def _check(batch, d_model, d_sae, seed):
    k1, k2, k3 = jax.random.split(jax.random.PRNGKey(seed), 3)
    x = jax.random.normal(k1, (batch, d_model), dtype=jnp.float32)
    x_hat = x + 0.1 * jax.random.normal(k2, (batch, d_model), dtype=jnp.float32)
    # SAE hidden activations are post-ReLU (non-negative, sparse-ish).
    f_x = jax.nn.relu(jax.random.normal(k3, (batch, d_sae), dtype=jnp.float32))

    out = vanilla_objective(x, f_x, x_hat)
    out = jax.tree_util.tree_map(jax.block_until_ready, out)
    ref = _reference(x, f_x, x_hat)
    for k in out:
        assert jnp.allclose(out[k], ref[k], rtol=2e-5, atol=1e-5), (k, out[k], ref[k])


if __name__ == "__main__":
    _check(batch=16, d_model=32, d_sae=64, seed=0)   # tile-aligned case
    _check(batch=13, d_model=24, d_sae=40, seed=1)   # ragged batch + ragged feature dims
    print("KERNEL_OK")
</pallas_src>

<mosaic_0001>
module attributes {stable_mosaic.version = 11 : i64} {
  func.func @kernel(%arg0: i32, %arg1: i32, %arg2: memref<16x32xf32, #tpu.memory_space<vmem>>, %arg3: memref<16x32xf32, #tpu.memory_space<vmem>>, %arg4: memref<16x64xf32, #tpu.memory_space<vmem>>, %arg5: memref<1x1xf32, #tpu.memory_space<smem>>, %arg6: memref<1x1xf32, #tpu.memory_space<smem>>, %arg7: memref<1x1xf32, #tpu.memory_space<smem>>, %arg8: memref<8x32xf32, #tpu.memory_space<vmem>>, %arg9: memref<8x64xf32, #tpu.memory_space<vmem>>, %arg10: memref<8x64xf32, #tpu.memory_space<vmem>>) attributes {dimension_semantics = [#tpu.dimension_semantics<parallel>, #tpu.dimension_semantics<arbitrary>], iteration_bounds = array<i64: 1, 1>, scalar_prefetch = 0 : i64, scratch_operands = 3 : i64, tpu.core_type = #tpu.core_type<tc>, window_params = [{transform_indices = @transform_0, window_bounds = array<i64: 16, 32>}, {transform_indices = @transform_1, window_bounds = array<i64: 16, 32>}, {transform_indices = @transform_2, window_bounds = array<i64: 16, 64>}, {transform_indices = @transform_3, window_bounds = array<i64: 1, 1>}, {transform_indices = @transform_4, window_bounds = array<i64: 1, 1>}, {transform_indices = @transform_5, window_bounds = array<i64: 1, 1>}]} {
    %c0_i32 = arith.constant 0 : i32
    %0 = arith.cmpi eq, %arg1, %c0_i32 : i32
    %1 = arith.extui %0 : i1 to i32
    %c0_i32_0 = arith.constant 0 : i32
    %2 = arith.cmpi ne, %1, %c0_i32_0 : i32
    scf.if %2 {
      %cst_35 = arith.constant 0.000000e+00 : f32
      %52 = vector.broadcast %cst_35 : f32 to vector<8x32xf32>
      %c0_36 = arith.constant 0 : index
      %c0_37 = arith.constant 0 : index
      %53 = vector.load %arg8[%c0_36, %c0_37] : memref<8x32xf32, #tpu.memory_space<vmem>>, vector<8x32xf32>
      tpu.vector_store %arg8[%c0_36, %c0_37], %52 {strides = array<i32>} : memref<8x32xf32, #tpu.memory_space<vmem>>, vector<8x32xf32>,
      %cst_38 = arith.constant 0.000000e+00 : f32
      %54 = vector.broadcast %cst_38 : f32 to vector<8x64xf32>
      %c0_39 = arith.constant 0 : index
      %c0_40 = arith.constant 0 : index
      %55 = vector.load %arg9[%c0_39, %c0_40] : memref<8x64xf32, #tpu.memory_space<vmem>>, vector<8x64xf32>
      tpu.vector_store %arg9[%c0_39, %c0_40], %54 {strides = array<i32>} : memref<8x64xf32, #tpu.memory_space<vmem>>, vector<8x64xf32>,
      %cst_41 = arith.constant 0.000000e+00 : f32
      %56 = vector.broadcast %cst_41 : f32 to vector<8x64xf32>
      %c0_42 = arith.constant 0 : index
      %c0_43 = arith.constant 0 : index
      %57 = vector.load %arg10[%c0_42, %c0_43] : memref<8x64xf32, #tpu.memory_space<vmem>>, vector<8x64xf32>
      tpu.vector_store %arg10[%c0_42, %c0_43], %56 {strides = array<i32>} : memref<8x64xf32, #tpu.memory_space<vmem>>, vector<8x64xf32>,
    } else {
    }
    %c0_i32_1 = arith.constant 0 : i32
    %c8_i32 = arith.constant 8 : i32
    %3 = arith.muli %c0_i32_1, %c8_i32 : i32
    %4 = tpu.assume_multiple %3, 8 : i32
    %5 = arith.index_cast %4 : i32 to index
    %c0 = arith.constant 0 : index
    %6 = vector.load %arg2[%5, %c0] : memref<16x32xf32, #tpu.memory_space<vmem>>, vector<8x32xf32>
    %7 = arith.index_cast %4 : i32 to index
    %c0_2 = arith.constant 0 : index
    %8 = vector.load %arg3[%7, %c0_2] : memref<16x32xf32, #tpu.memory_space<vmem>>, vector<8x32xf32>
    %9 = arith.index_cast %4 : i32 to index
    %c0_3 = arith.constant 0 : index
    %10 = vector.load %arg4[%9, %c0_3] : memref<16x64xf32, #tpu.memory_space<vmem>>, vector<8x64xf32>
    %11 = arith.subf %8, %6 : vector<8x32xf32>
    %12 = arith.mulf %11, %11 : vector<8x32xf32>
    %cst = arith.constant 0.000000e+00 : f32
    %13 = vector.broadcast %cst : f32 to vector<8x64xf32>
    %14 = arith.cmpf ogt, %10, %13 : vector<8x64xf32>
    %15 = arith.extui %14 : vector<8x64xi1> to vector<8x64xi32>
    %16 = arith.sitofp %15 : vector<8x64xi32> to vector<8x64xf32>
    %c0_4 = arith.constant 0 : index
    %c0_5 = arith.constant 0 : index
    %17 = vector.load %arg8[%c0_4, %c0_5] : memref<8x32xf32, #tpu.memory_space<vmem>>, vector<8x32xf32>
    %18 = arith.addf %17, %12 : vector<8x32xf32>
    %c0_6 = arith.constant 0 : index
    %c0_7 = arith.constant 0 : index
    %19 = vector.load %arg8[%c0_6, %c0_7] : memref<8x32xf32, #tpu.memory_space<vmem>>, vector<8x32xf32>
    tpu.vector_store %arg8[%c0_6, %c0_7], %18 {strides = array<i32>} : memref<8x32xf32, #tpu.memory_space<vmem>>, vector<8x32xf32>,
    %c0_8 = arith.constant 0 : index
    %c0_9 = arith.constant 0 : index
    %20 = vector.load %arg9[%c0_8, %c0_9] : memref<8x64xf32, #tpu.memory_space<vmem>>, vector<8x64xf32>
    %21 = arith.addf %20, %16 : vector<8x64xf32>
    %c0_10 = arith.constant 0 : index
    %c0_11 = arith.constant 0 : index
    %22 = vector.load %arg9[%c0_10, %c0_11] : memref<8x64xf32, #tpu.memory_space<vmem>>, vector<8x64xf32>
    tpu.vector_store %arg9[%c0_10, %c0_11], %21 {strides = array<i32>} : memref<8x64xf32, #tpu.memory_space<vmem>>, vector<8x64xf32>,
    %c0_12 = arith.constant 0 : index
    %c0_13 = arith.constant 0 : index
    %23 = vector.load %arg10[%c0_12, %c0_13] : memref<8x64xf32, #tpu.memory_space<vmem>>, vector<8x64xf32>
    %24 = arith.addf %23, %10 : vector<8x64xf32>
    %c0_14 = arith.constant 0 : index
    %c0_15 = arith.constant 0 : index
    %25 = vector.load %arg10[%c0_14, %c0_15] : memref<8x64xf32, #tpu.memory_space<vmem>>, vector<8x64xf32>
    tpu.vector_store %arg10[%c0_14, %c0_15], %24 {strides = array<i32>} : memref<8x64xf32, #tpu.memory_space<vmem>>, vector<8x64xf32>,
    %c1_i32 = arith.constant 1 : i32
    %c8_i32_16 = arith.constant 8 : i32
    %26 = arith.muli %c1_i32, %c8_i32_16 : i32
    %27 = tpu.assume_multiple %26, 8 : i32
    %28 = arith.index_cast %27 : i32 to index
    %c0_17 = arith.constant 0 : index
    %29 = vector.load %arg2[%28, %c0_17] : memref<16x32xf32, #tpu.memory_space<vmem>>, vector<8x32xf32>
    %30 = arith.index_cast %27 : i32 to index
    %c0_18 = arith.constant 0 : index
    %31 = vector.load %arg3[%30, %c0_18] : memref<16x32xf32, #tpu.memory_space<vmem>>, vector<8x32xf32>
    %32 = arith.index_cast %27 : i32 to index
    %c0_19 = arith.constant 0 : index
    %33 = vector.load %arg4[%32, %c0_19] : memref<16x64xf32, #tpu.memory_space<vmem>>, vector<8x64xf32>
    %34 = arith.subf %31, %29 : vector<8x32xf32>
    %35 = arith.mulf %34, %34 : vector<8x32xf32>
    %cst_20 = arith.constant 0.000000e+00 : f32
    %36 = vector.broadcast %cst_20 : f32 to vector<8x64xf32>
    %37 = arith.cmpf ogt, %33, %36 : vector<8x64xf32>
    %38 = arith.extui %37 : vector<8x64xi1> to vector<8x64xi32>
    %39 = arith.sitofp %38 : vector<8x64xi32> to vector<8x64xf32>
    %c0_21 = arith.constant 0 : index
    %c0_22 = arith.constant 0 : index
    %40 = vector.load %arg8[%c0_21, %c0_22] : memref<8x32xf32, #tpu.memory_space<vmem>>, vector<8x32xf32>
    %41 = arith.addf %40, %35 : vector<8x32xf32>
    %c0_23 = arith.constant 0 : index
    %c0_24 = arith.constant 0 : index
    %42 = vector.load %arg8[%c0_23, %c0_24] : memref<8x32xf32, #tpu.memory_space<vmem>>, vector<8x32xf32>
    tpu.vector_store %arg8[%c0_23, %c0_24], %41 {strides = array<i32>} : memref<8x32xf32, #tpu.memory_space<vmem>>, vector<8x32xf32>,
    %c0_25 = arith.constant 0 : index
    %c0_26 = arith.constant 0 : index
    %43 = vector.load %arg9[%c0_25, %c0_26] : memref<8x64xf32, #tpu.memory_space<vmem>>, vector<8x64xf32>
    %44 = arith.addf %43, %39 : vector<8x64xf32>
    %c0_27 = arith.constant 0 : index
    %c0_28 = arith.constant 0 : index
    %45 = vector.load %arg9[%c0_27, %c0_28] : memref<8x64xf32, #tpu.memory_space<vmem>>, vector<8x64xf32>
    tpu.vector_store %arg9[%c0_27, %c0_28], %44 {strides = array<i32>} : memref<8x64xf32, #tpu.memory_space<vmem>>, vector<8x64xf32>,
    %c0_29 = arith.constant 0 : index
    %c0_30 = arith.constant 0 : index
    %46 = vector.load %arg10[%c0_29, %c0_30] : memref<8x64xf32, #tpu.memory_space<vmem>>, vector<8x64xf32>
    %47 = arith.addf %46, %33 : vector<8x64xf32>
    %c0_31 = arith.constant 0 : index
    %c0_32 = arith.constant 0 : index
    %48 = vector.load %arg10[%c0_31, %c0_32] : memref<8x64xf32, #tpu.memory_space<vmem>>, vector<8x64xf32>
    tpu.vector_store %arg10[%c0_31, %c0_32], %47 {strides = array<i32>} : memref<8x64xf32, #tpu.memory_space<vmem>>, vector<8x64xf32>,
    %c2_i32 = arith.constant 2 : i32
    %c0_i32_33 = arith.constant 0 : i32
    %49 = arith.cmpi eq, %arg1, %c0_i32_33 : i32
    %50 = arith.extui %49 : i1 to i32
    %c0_i32_34 = arith.constant 0 : i32
    %51 = arith.cmpi ne, %50, %c0_i32_34 : i32
    scf.if %51 {
      %c0_35 = arith.constant 0 : index
      %c0_36 = arith.constant 0 : index
      %52 = vector.load %arg8[%c0_35, %c0_36] : memref<8x32xf32, #tpu.memory_space<vmem>>, vector<8x32xf32>
      %53 = vector.shape_cast %52 : vector<8x32xf32> to vector<1x8x32xf32>
      %cst_37 = arith.constant dense<0.000000e+00> : vector<1xf32>
      %54 = vector.multi_reduction <add>, %53, %cst_37 [1, 2] : vector<1x8x32xf32> to vector<1xf32>
      %55 = vector.shape_cast %54 : vector<1xf32> to vector<1x1x1xf32>
      %56 = vector.extract %55[0, 0, 0] : f32 from vector<1x1x1xf32>
      %c0_38 = arith.constant 0 : index
      %c0_39 = arith.constant 0 : index
      %57 = memref.load %arg5[%c0_38, %c0_39] : memref<1x1xf32, #tpu.memory_space<smem>>
      memref.store %56, %arg5[%c0_38, %c0_39] : memref<1x1xf32, #tpu.memory_space<smem>>
      %c0_40 = arith.constant 0 : index
      %c0_41 = arith.constant 0 : index
      %58 = vector.load %arg9[%c0_40, %c0_41] : memref<8x64xf32, #tpu.memory_space<vmem>>, vector<8x64xf32>
      %59 = vector.shape_cast %58 : vector<8x64xf32> to vector<1x8x64xf32>
      %cst_42 = arith.constant dense<0.000000e+00> : vector<1xf32>
      %60 = vector.multi_reduction <add>, %59, %cst_42 [1, 2] : vector<1x8x64xf32> to vector<1xf32>
      %61 = vector.shape_cast %60 : vector<1xf32> to vector<1x1x1xf32>
      %62 = vector.extract %61[0, 0, 0] : f32 from vector<1x1x1xf32>
      %c0_43 = arith.constant 0 : index
      %c0_44 = arith.constant 0 : index
      %63 = memref.load %arg6[%c0_43, %c0_44] : memref<1x1xf32, #tpu.memory_space<smem>>
      memref.store %62, %arg6[%c0_43, %c0_44] : memref<1x1xf32, #tpu.memory_space<smem>>
      %c0_45 = arith.constant 0 : index
      %c0_46 = arith.constant 0 : index
      %64 = vector.load %arg10[%c0_45, %c0_46] : memref<8x64xf32, #tpu.memory_space<vmem>>, vector<8x64xf32>
      %65 = vector.shape_cast %64 : vector<8x64xf32> to vector<1x8x64xf32>
      %cst_47 = arith.constant dense<0.000000e+00> : vector<1xf32>
      %66 = vector.multi_reduction <add>, %65, %cst_47 [1, 2] : vector<1x8x64xf32> to vector<1xf32>
      %67 = vector.shape_cast %66 : vector<1xf32> to vector<1x1x1xf32>
      %68 = vector.extract %67[0, 0, 0] : f32 from vector<1x1x1xf32>
      %c0_48 = arith.constant 0 : index
      %c0_49 = arith.constant 0 : index
      %69 = memref.load %arg7[%c0_48, %c0_49] : memref<1x1xf32, #tpu.memory_space<smem>>
      memref.store %68, %arg7[%c0_48, %c0_49] : memref<1x1xf32, #tpu.memory_space<smem>>
    } else {
    }
    return
  }
  func.func @transform_0(%arg0: i32, %arg1: i32) -> (i32, i32) {
    %c1_i32 = arith.constant 1 : i32
    %0 = arith.muli %arg0, %c1_i32 : i32
    %1 = arith.addi %0, %arg1 : i32
    %c0_i32 = arith.constant 0 : i32
    %2 = arith.minsi %1, %c0_i32 : i32
    %c0_i32_0 = arith.constant 0 : i32
    %c0_i32_1 = arith.constant 0 : i32
    return %2, %c0_i32_0 : i32, i32
  }
  func.func @transform_1(%arg0: i32, %arg1: i32) -> (i32, i32) {
    %c1_i32 = arith.constant 1 : i32
    %0 = arith.muli %arg0, %c1_i32 : i32
    %1 = arith.addi %0, %arg1 : i32
    %c0_i32 = arith.constant 0 : i32
    %2 = arith.minsi %1, %c0_i32 : i32
    %c0_i32_0 = arith.constant 0 : i32
    %c0_i32_1 = arith.constant 0 : i32
    return %2, %c0_i32_0 : i32, i32
  }
  func.func @transform_2(%arg0: i32, %arg1: i32) -> (i32, i32) {
    %c1_i32 = arith.constant 1 : i32
    %0 = arith.muli %arg0, %c1_i32 : i32
    %1 = arith.addi %0, %arg1 : i32
    %c0_i32 = arith.constant 0 : i32
    %2 = arith.minsi %1, %c0_i32 : i32
    %c0_i32_0 = arith.constant 0 : i32
    %c0_i32_1 = arith.constant 0 : i32
    return %2, %c0_i32_0 : i32, i32
  }
  func.func @transform_3(%arg0: i32, %arg1: i32) -> (i32, i32) {
    %c0_i32 = arith.constant 0 : i32
    %c0_i32_0 = arith.constant 0 : i32
    return %arg0, %c0_i32 : i32, i32
  }
  func.func @transform_4(%arg0: i32, %arg1: i32) -> (i32, i32) {
    %c0_i32 = arith.constant 0 : i32
    %c0_i32_0 = arith.constant 0 : i32
    return %arg0, %c0_i32 : i32, i32
  }
  func.func @transform_5(%arg0: i32, %arg1: i32) -> (i32, i32) {
    %c0_i32 = arith.constant 0 : i32
    %c0_i32_0 = arith.constant 0 : i32
    return %arg0, %c0_i32 : i32, i32
  }
}

</mosaic_0001>

<llo_original>
// kernel: tpu_custom_call.1
$region0: #{tpu_custom_call.1}
  #allocation0 [shape = 'u32[]', space=smem, size = 0x4, offset = 0x4, fixed_abs, tag = 'smem constant byte address 0x4 - core index']
  #allocation1 [shape = 'u32[144,128]{1,0:T(1,128)}', space=vmem, size = 0x12000, scoped, tag = 'internal scratch']
  #allocation2 [shape = 'f32[8,32]{1,0:T(8,128)}', space=vmem, size = 0x1000, scoped, tag = 'scratch operand']
  #allocation3 [shape = 'f32[8,64]{1,0:T(8,128)}', space=vmem, size = 0x1000, scoped, tag = 'scratch operand']
  #allocation4 [shape = 'f32[8,64]{1,0:T(8,128)}', space=vmem, size = 0x1000, scoped, tag = 'scratch operand']
  %s0 = inlined_call_operand.hbm [shape: f32[16,32], index: 0, kind: input, shape index: {}]
  %s1 = inlined_call_operand.hbm [shape: f32[16,32], index: 1, kind: input, shape index: {}]
  %s2 = inlined_call_operand.hbm [shape: f32[16,64], index: 2, kind: input, shape index: {}]
  %s3 = inlined_call_operand.hbm [shape: f32[1,1], index: 3, kind: output, shape index: {0}]
  %s4 = inlined_call_operand.hbm [shape: f32[1,1], index: 4, kind: output, shape index: {1}]
  %s5 = inlined_call_operand.hbm [shape: f32[1,1], index: 5, kind: output, shape index: {2}]
  %6 = xla_tuple %s3, %s4, %s5
  %s7 = sld [smem:[#allocation0]]
  $region58: #{tpu_custom_call.1} parent=0
    _
  %s9 = ssub.s32 1, %s7
  %s10 = scalar_select 0, %s9, %s7
  $region1: #{tpu_custom_call.1} parent=0
    #allocation5 [shape = 'u8[8192]{0}', space=vmem, size = 0x2000, scoped, tag = 'input window, operand 0, single buffered']
    #allocation6 [shape = 's32[1]{0}', space=sflag, size = 0x4, scoped, tag = 'scoped memory for tpu_custom_call.1']
    #allocation7 [shape = 's32[1]{0}', space=sflag, size = 0x4, scoped, tag = 'scoped memory for tpu_custom_call.1']
    #allocation8 [shape = 'u8[8192]{0}', space=vmem, size = 0x2000, scoped, tag = 'input window, operand 1, single buffered']
    #allocation9 [shape = 's32[1]{0}', space=sflag, size = 0x4, scoped, tag = 'scoped memory for tpu_custom_call.1']
    #allocation10 [shape = 'u8[8192]{0}', space=vmem, size = 0x2000, scoped, tag = 'input window, operand 2, single buffered']
    #allocation11 [shape = 'u8[512]{0}', space=smem, size = 0x200, scoped, tag = 'output window, operand 0, single buffered']
    #allocation12 [shape = 'u8[512]{0}', space=smem, size = 0x200, scoped, tag = 'output window, operand 1, single buffered']
    #allocation13 [shape = 's32[1]{0}', space=sflag, size = 0x4, scoped, tag = 'scoped memory for tpu_custom_call.1']
    #allocation14 [shape = 'u8[512]{0}', space=smem, size = 0x200, scoped, tag = 'output window, operand 2, single buffered']
    %11 = vsyncpa [#allocation6], 0
    %12 = vsyncpa [#allocation9], 0
    %13 = vsyncpa [#allocation7], 0
    %14 = vsyncpa [#allocation13], 0
    // Predicated region
    $region2: #{tpu_custom_call.1} parent=1 // pred_check
      _
    $region3: #{tpu_custom_call.1} parent=1 // pred_check_branch
      %16 = sbr.rel (0) target = $region5
    $region4: #{tpu_custom_call.1} parent=1 // pred_region
      %s17 = sadd.s32 0, 0
      %p18 = scmp.lt.s32.totalorder %s17, 0
      %s19 = scalar_select %p18, %s17, 0
      %s20 = smul.u32 2, %s19
      %s22 = ssub.s32 256, 256
      %23 = vsyncadd [#allocation6], %s22
      %s24 = smul.addr %s20, 128
      %s25 = scalar_lea.hbm %s0, %s24
      %s26 = sshll.u32 [#allocation5], 4
      %s27 = int_to_ptr.vmem [resolvable:$true] %s26
      %32 = dma.hbm_to_vmem [thread:$0]  %s25, 256, %s27, [#allocation6], 128, 128, 8
    $region5: #{tpu_custom_call.1} parent=1 // pred_fallthru
      _
    // Predicated region
    $region6: #{tpu_custom_call.1} parent=1 // pred_check
      _
    $region7: #{tpu_custom_call.1} parent=1 // pred_check_branch
      %34 = sbr.rel (0) target = $region9
    $region8: #{tpu_custom_call.1} parent=1 // pred_region
      %s35 = sadd.s32 0, 0
      %p36 = scmp.lt.s32.totalorder %s35, 0
      %s37 = scalar_select %p36, %s35, 0
      %s38 = smul.u32 2, %s37
      %s40 = ssub.s32 256, 256
      %41 = vsyncadd [#allocation9], %s40
      %s42 = smul.addr %s38, 128
      %s43 = scalar_lea.hbm %s1, %s42
      %s44 = sshll.u32 [#allocation8], 4
      %s45 = int_to_ptr.vmem [resolvable:$true] %s44
      %50 = dma.hbm_to_vmem [thread:$0]  %s43, 256, %s45, [#allocation9], 128, 128, 8
    $region9: #{tpu_custom_call.1} parent=1 // pred_fallthru
      _
    // Predicated region
    $region10: #{tpu_custom_call.1} parent=1 // pred_check
      _
    $region11: #{tpu_custom_call.1} parent=1 // pred_check_branch
      %52 = sbr.rel (0) target = $region13
    $region12: #{tpu_custom_call.1} parent=1 // pred_region
      %s53 = sadd.s32 0, 0
      %p54 = scmp.lt.s32.totalorder %s53, 0
      %s55 = scalar_select %p54, %s53, 0
      %s56 = smul.u32 2, %s55
      %s58 = ssub.s32 256, 256
      %59 = vsyncadd [#allocation9], %s58
      %s60 = smul.addr %s56, 128
      %s61 = scalar_lea.hbm %s2, %s60
      %s62 = sshll.u32 [#allocation10], 4
      %s63 = int_to_ptr.vmem [resolvable:$true] %s62
      %68 = dma.hbm_to_vmem [thread:$0]  %s61, 256, %s63, [#allocation9], 128, 128, 8
    $region13: #{tpu_custom_call.1} parent=1 // pred_fallthru
      _
    // Predicated region
    $region14: #{tpu_custom_call.1} parent=1 // pred_check
      _
    $region15: #{tpu_custom_call.1} parent=1 // pred_check_branch
      %70 = sbr.rel (0) target = $region17
    $region16: #{tpu_custom_call.1} parent=1 // pred_region
      %71 = dma.done [#allocation6], 256
    $region17: #{tpu_custom_call.1} parent=1 // pred_fallthru
      _
    // Predicated region
    $region18: #{tpu_custom_call.1} parent=1 // pred_check
      _
    $region19: #{tpu_custom_call.1} parent=1 // pred_check_branch
      %73 = sbr.rel (0) target = $region21
    $region20: #{tpu_custom_call.1} parent=1 // pred_region
      %74 = dma.done [#allocation9], 256
    $region21: #{tpu_custom_call.1} parent=1 // pred_fallthru
      _
    // Predicated region
    $region22: #{tpu_custom_call.1} parent=1 // pred_check
      _
    $region23: #{tpu_custom_call.1} parent=1 // pred_check_branch
      %76 = sbr.rel (0) target = $region25
    $region24: #{tpu_custom_call.1} parent=1 // pred_region
      %77 = dma.done [#allocation9], 256
    $region25: #{tpu_custom_call.1} parent=1 // pred_fallthru
      _
    %s78 = sadd.s32 0, 0
    %p79 = scmp.lt.s32.totalorder %s78, 0
    %s80 = scalar_select %p79, %s78, 0
    %s81 = smul.u32 2, %s80
    %s82 = sadd.s32 0, 0
    %p83 = scmp.lt.s32.totalorder %s82, 0
    %s84 = scalar_select %p83, %s82, 0
    %s85 = smul.u32 2, %s84
    %s86 = sadd.s32 0, 0
    %p87 = scmp.lt.s32.totalorder %s86, 0
    %s88 = scalar_select %p87, %s86, 0
    %s89 = smul.u32 2, %s88
    %p90 = scmp.eq.s32.totalorder 0, 0
    // Predicated region
    $region26: #{tpu_custom_call.1} parent=1 // pred_check
      %p91 = pneg %p90
    $region27: #{tpu_custom_call.1} parent=1 // pred_check_branch
      %93 = sbr.rel (%p91) target = $region29
    $region28: #{tpu_custom_call.1} parent=1 // pred_region
      %vm94 = vcmask 261120
      %95 = vst.msk [vmem:[#allocation2] sm:$0xff] %vm94, 0.0
      %vm96 = vcmask 523264
      %97 = vst.msk [vmem:[#allocation3] sm:$0xff] %vm96, 0.0
      %98 = vst.msk [vmem:[#allocation4] sm:$0xff] %vm96, 0.0
    $region29: #{tpu_custom_call.1} parent=1 // pred_fallthru
      _
    %v99 = vld [vmem:[#allocation5] sm:$0xff]
    %v100 = vld [vmem:[#allocation8] sm:$0xff]
    %v101 = vld [vmem:[#allocation10] sm:$0xff]
    %v102 = vsub.f32 %v100, %v99
    %v103 = vmul.f32 %v102, %v102
    %vm104 = vcmp.gt.f32.partialorder %v101, 0.0
    %v105 = vsel %vm104, 1, 0
    %v106 = vcvt.s32.f32 %v105
    %v107 = vld [vmem:[#allocation2] sm:$0xff]
    %v108 = vadd.f32 %v107, %v103
    %vm109 = vcmask 261120
    %110 = vst.msk [vmem:[#allocation2] sm:$0xff] %vm109, %v108
    %v111 = vld [vmem:[#allocation3] sm:$0xff]
    %v112 = vadd.f32 %v111, %v106
    %vm113 = vcmask 523264
    %114 = vst.msk [vmem:[#allocation3] sm:$0xff] %vm113, %v112
    %v115 = vld [vmem:[#allocation4] sm:$0xff]
    %v116 = vadd.f32 %v115, %v101
    %117 = vst.msk [vmem:[#allocation4] sm:$0xff] %vm113, %v116
    %s118 = scalar_lea.vmem [#allocation5], 8
    %v119 = vld [vmem:[%s118] sm:$0xff]
    %s120 = scalar_lea.vmem [#allocation8], 8
    %v121 = vld [vmem:[%s120] sm:$0xff]
    %s122 = scalar_lea.vmem [#allocation10], 8
    %v123 = vld [vmem:[%s122] sm:$0xff]
    %v124 = vsub.f32 %v121, %v119
    %v125 = vmul.f32 %v124, %v124
    %vm126 = vcmp.gt.f32.partialorder %v123, 0.0
    %v127 = vsel %vm126, 1, 0
    %v128 = vcvt.s32.f32 %v127
    %v129 = vld [vmem:[#allocation2] sm:$0xff]
    %v130 = vadd.f32 %v129, %v125
    %131 = vst.msk [vmem:[#allocation2] sm:$0xff] %vm109, %v130
    %v132 = vld [vmem:[#allocation3] sm:$0xff]
    %v133 = vadd.f32 %v132, %v128
    %134 = vst.msk [vmem:[#allocation3] sm:$0xff] %vm113, %v133
    %v135 = vld [vmem:[#allocation4] sm:$0xff]
    %v136 = vadd.f32 %v135, %v123
    %137 = vst.msk [vmem:[#allocation4] sm:$0xff] %vm113, %v136
    // Predicated region
    $region30: #{tpu_custom_call.1} parent=1 // pred_check
      %p138 = pneg %p90
    $region31: #{tpu_custom_call.1} parent=1 // pred_check_branch
      %140 = sbr.rel (%p138) target = $region33
    $region32: #{tpu_custom_call.1} parent=1 // pred_region
      %v141 = vld [vmem:[#allocation2] sm:$0xff]
      %v142 = vsel %vm109, %v141, 0.0
      %143 = vadd.xlane.f32.xlu0 %v142
      %v144 = vpop.xlane.xlu0 %143
      %v145 = vrot.slane %v144, 4
      %v146 = vadd.f32 %v144, %v145
      %v147 = vrot.slane %v146, 2
      %v148 = vadd.f32 %v146, %v147
      %v149 = vrot.slane %v148, 1
      %v150 = vadd.f32 %v148, %v149
      %s151 = vtos %v150
      %s152 = scalar_lea.smem [#allocation11], 0
      %153 = sst [smem:[%s152]] %s151
      %v154 = vld [vmem:[#allocation3] sm:$0xff]
      %v155 = vsel %vm113, %v154, 0.0
      %156 = vadd.xlane.f32.xlu0 %v155
      %v157 = vpop.xlane.xlu0 %156
      %v158 = vrot.slane %v157, 4
      %v159 = vadd.f32 %v157, %v158
      %v160 = vrot.slane %v159, 2
      %v161 = vadd.f32 %v159, %v160
      %v162 = vrot.slane %v161, 1
      %v163 = vadd.f32 %v161, %v162
      %s164 = vtos %v163
      %s165 = scalar_lea.smem [#allocation12], 0
      %166 = sst [smem:[%s165]] %s164
      %v167 = vld [vmem:[#allocation4] sm:$0xff]
      %v168 = vsel %vm113, %v167, 0.0
      %169 = vadd.xlane.f32.xlu0 %v168
      %v170 = vpop.xlane.xlu0 %169
      %v171 = vrot.slane %v170, 4
      %v172 = vadd.f32 %v170, %v171
      %v173 = vrot.slane %v172, 2
      %v174 = vadd.f32 %v172, %v173
      %v175 = vrot.slane %v174, 1
      %v176 = vadd.f32 %v174, %v175
      %s177 = vtos %v176
      %s178 = scalar_lea.smem [#allocation14], 0
      %179 = sst [smem:[%s178]] %s177
    $region33: #{tpu_custom_call.1} parent=1 // pred_fallthru
      _
    // Predicated region
    $region34: #{tpu_custom_call.1} parent=1 // pred_check
      _
    $region35: #{tpu_custom_call.1} parent=1 // pred_check_branch
      %181 = sbr.rel (0) target = $region37
    $region36: #{tpu_custom_call.1} parent=1 // pred_region
      %s183 = ssub.s32 16, 16
      %184 = vsyncadd [#allocation7], %s183
      %187 = dma.smem_to_hbm [#allocation11], 16, %s3, [#allocation7]
    $region37: #{tpu_custom_call.1} parent=1 // pred_fallthru
      _
    // Predicated region
    $region38: #{tpu_custom_call.1} parent=1 // pred_check
      _
    $region39: #{tpu_custom_call.1} parent=1 // pred_check_branch
      %189 = sbr.rel (0) target = $region41
    $region40: #{tpu_custom_call.1} parent=1 // pred_region
      %s191 = ssub.s32 16, 16
      %192 = vsyncadd [#allocation13], %s191
      %195 = dma.smem_to_hbm [#allocation12], 16, %s4, [#allocation13]
    $region41: #{tpu_custom_call.1} parent=1 // pred_fallthru
      _
    // Predicated region
    $region42: #{tpu_custom_call.1} parent=1 // pred_check
      _
    $region43: #{tpu_custom_call.1} parent=1 // pred_check_branch
      %197 = sbr.rel (0) target = $region45
    $region44: #{tpu_custom_call.1} parent=1 // pred_region
      %s199 = ssub.s32 16, 16
      %200 = vsyncadd [#allocation13], %s199
      %203 = dma.smem_to_hbm [#allocation14], 16, %s5, [#allocation13]
    $region45: #{tpu_custom_call.1} parent=1 // pred_fallthru
      _
    // Predicated region
    $region46: #{tpu_custom_call.1} parent=1 // pred_check
      _
    $region47: #{tpu_custom_call.1} parent=1 // pred_check_branch
      %205 = sbr.rel (0) target = $region49
    $region48: #{tpu_custom_call.1} parent=1 // pred_region
      %206 = dma.done [#allocation7], 16
    $region49: #{tpu_custom_call.1} parent=1 // pred_fallthru
      _
    // Predicated region
    $region50: #{tpu_custom_call.1} parent=1 // pred_check
      _
    $region51: #{tpu_custom_call.1} parent=1 // pred_check_branch
      %208 = sbr.rel (0) target = $region53
    $region52: #{tpu_custom_call.1} parent=1 // pred_region
      %209 = dma.done [#allocation13], 16
    $region53: #{tpu_custom_call.1} parent=1 // pred_fallthru
      _
    // Predicated region
    $region54: #{tpu_custom_call.1} parent=1 // pred_check
      _
    $region55: #{tpu_custom_call.1} parent=1 // pred_check_branch
      %211 = sbr.rel (0) target = $region57
    $region56: #{tpu_custom_call.1} parent=1 // pred_region
      %212 = dma.done [#allocation13], 16
    $region57: #{tpu_custom_call.1} parent=1 // pred_fallthru
      _
    %213 = sfence
    %214 = vsyncpa [#allocation6], 1
    %215 = vsyncpa [#allocation9], 1
    %216 = vsyncpa [#allocation7], 1
    %217 = vsyncpa [#allocation13], 1

</llo_original>
